<compile_context>
chip_gen: v5e
topology: v5e:2x2
jax: 0.10.0
libtpu: 0.0.40
codegen_flags: <defaults>
</compile_context>

<pallas_src>
import jax
import jax.numpy as jnp
from jax import lax
from jax.experimental import pallas as pl
from jax.experimental.pallas import tpu as pltpu


# ----------------------------- Pallas kernel --------------------------------

def _fused_attention_kernel(x_ref, mt_ref, rw_ref, wvg_ref, bvg_ref, ssum_ref,
                            o_ref):
    """One batch element, channel-major (lane dim = N).

    x_ref   : (1, ch, N)   input, NCHW-flat
    mt_ref  : (ch, ch)     (Wq_eff @ Wk_effᵀ)ᵀ
    rw_ref  : (ch, 1)      Wk_eff @ bqᵀ   (key-side bias cross-term)
    wvg_ref : (1, ch, ch)  per-batch gated value weights  (gamma & gate folded)
    bvg_ref : (1, ch, 1)   per-batch gated value bias
    ssum_ref: (1, ch, 1)   per-batch sum of gate weights (residual coefficient)
    o_ref   : (1, ch, N)   output, NCHW-flat
    """
    xT = x_ref[0]                                                     # (ch, N)

    # energy in key-major form S[j, i]; query-only bias terms dropped (they
    # cancel in the softmax over keys).  Folding rw into A keeps it one dot.
    a = jnp.dot(mt_ref[...], xT, preferred_element_type=jnp.float32) \
        + rw_ref[...]                                                 # (ch, N)
    s_km = lax.dot_general(xT, a, (((0,), (0,)), ((), ())),
                           preferred_element_type=jnp.float32)        # (N, N)

    # softmax over keys == axis 0 of the key-major energy (unnormalized).
    m = jnp.max(s_km, axis=0, keepdims=True)                          # (1, N)
    p = jnp.exp(s_km - m)                                             # (N, N)
    denom = jnp.sum(p, axis=0, keepdims=True)                         # (1, N)

    # gate- and gamma-folded value projection, channel-major.
    vg = jnp.dot(wvg_ref[0], xT, preferred_element_type=jnp.float32) \
        + bvg_ref[0]                                                  # (ch, N)

    # attention-weighted values; normalize after the matmul (cheaper).
    num = jnp.dot(vg, p, preferred_element_type=jnp.float32)          # (ch, N)

    # residual: sum_h s_h * x  ==  s_sum * x
    o_ref[0] = num / denom + ssum_ref[0] * xT


# ------------------------------ Host wrapper ---------------------------------

def multiple_self_attention(x, params, num_heads):
    """x: (B, ch, H, W) float32 (NCHW). Returns (B, ch, H, W)."""
    B, ch, H, W = x.shape
    n = num_heads
    C = n * ch
    N = H * W
    Cq = params["wq_t"].shape[1]

    # ---- host (tiny, XLA): gate s = L1-normalized sigmoid(fc(maxpool(x))) ----
    h2, w2 = H // 2, W // 2
    pooled = x.reshape(B, ch, h2, 2, w2, 2).max(axis=(3, 5)).reshape(B, -1)
    s = jax.nn.sigmoid(pooled @ params["wfc_t"] + params["bfc"])       # (B, n)
    s = s / jnp.maximum(jnp.sum(jnp.abs(s), axis=1, keepdims=True), 1e-12)
    s_sum = jnp.sum(s, axis=1)                                         # (B,)

    # ---- host: fold head replication / Wq·Wkᵀ / gamma / gate into weights ----
    gamma = params["gamma"][0, 0]
    wq_eff = params["wq_t"].reshape(n, ch, Cq).sum(0)                  # (ch, Cq)
    wk_eff = params["wk_t"].reshape(n, ch, Cq).sum(0)                  # (ch, Cq)
    wv_eff = params["wv_t"].reshape(n, ch, C).sum(0)                   # (ch, C)

    mt = (wq_eff @ wk_eff.T).T                                         # (ch, ch)
    rw = wk_eff @ params["bq"].T                                       # (ch, 1)

    wv_heads = (gamma * wv_eff).reshape(ch, n, ch)                     # (d, h, c)
    wvg = jnp.einsum("bh,dhc->bcd", s, wv_heads)                       # (B, ch, ch) = gated Wvᵀ
    bv_heads = (gamma * params["bv"][0]).reshape(n, ch)                # (h, c)
    bvg = jnp.einsum("bh,hc->bc", s, bv_heads)[:, :, None]             # (B, ch, 1)
    ssum = jnp.broadcast_to(s_sum[:, None, None], (B, ch, 1))          # (B, ch, 1)

    # Note: self.conv(x) in the reference forward is dead code (overwritten
    # by self.pool(x)), so it is intentionally not computed.

    # channel-major, NCHW-flat input (no tile, no transpose).
    x_cn = x.reshape(B, ch, N)

    out_cn = pl.pallas_call(
        _fused_attention_kernel,
        out_shape=jax.ShapeDtypeStruct((B, ch, N), jnp.float32),
        grid=(B,),
        in_specs=[
            pl.BlockSpec((1, ch, N), lambda b: (b, 0, 0)),   # x
            pl.BlockSpec((ch, ch), lambda b: (0, 0)),        # Mᵀ
            pl.BlockSpec((ch, 1), lambda b: (0, 0)),         # rw
            pl.BlockSpec((1, ch, ch), lambda b: (b, 0, 0)),  # gated Wvᵀ
            pl.BlockSpec((1, ch, 1), lambda b: (b, 0, 0)),   # gated bv
            pl.BlockSpec((1, ch, 1), lambda b: (b, 0, 0)),   # s_sum
        ],
        out_specs=pl.BlockSpec((1, ch, N), lambda b: (b, 0, 0)),
        compiler_params=pltpu.CompilerParams(
            dimension_semantics=("parallel",)),   # B=2 -> one per TC on v7x
    )(x_cn, mt, rw, wvg, bvg, ssum)

    # NCHW-flat -> NCHW (pure reshape, no transpose / copy).
    return out_cn.reshape(B, ch, H, W)


# ------------------------------ Pure-JAX reference ---------------------------

def reference_forward(x, params, num_heads):
    B, ch, H, W = x.shape
    n = num_heads
    C = n * ch
    N = H * W

    xh = jnp.tile(x, (1, n, 1, 1))
    x_nc = xh.reshape(B, C, N).transpose(0, 2, 1)                        # (B, N, C)
    q = x_nc @ params["wq_t"] + params["bq"]
    k = x_nc @ params["wk_t"] + params["bk"]
    v = x_nc @ params["wv_t"] + params["bv"]
    energy = jnp.einsum("bic,bjc->bij", q, k)
    energy = energy - jnp.max(energy, axis=-1, keepdims=True)
    p = jnp.exp(energy)
    attn = p / jnp.sum(p, axis=-1, keepdims=True)
    out = jnp.einsum("bij,bjc->bic", attn, v)
    xh_att = params["gamma"][0, 0] * out + x_nc                          # (B, N, C)
    xh_5d = xh_att.transpose(0, 2, 1).reshape(B, n, ch, H, W)

    h2, w2 = H // 2, W // 2
    pooled = x.reshape(B, ch, h2, 2, w2, 2).max(axis=(3, 5)).reshape(B, -1)
    s = jax.nn.sigmoid(pooled @ params["wfc_t"] + params["bfc"])
    s = s / jnp.maximum(jnp.sum(jnp.abs(s), axis=1, keepdims=True), 1e-12)
    return jnp.sum(xh_5d * s[:, :, None, None, None], axis=1)


# ----------------------------------- main ------------------------------------

if __name__ == "__main__":
    B, ch, H, W = 2, 4, 16, 16
    num_heads = 4
    C = num_heads * ch
    Cq = C // 8
    P = ch * (H // 2) * (W // 2)

    key = jax.random.PRNGKey(0)
    keys = jax.random.split(key, 10)

    x = jax.random.normal(keys[0], (B, ch, H, W), jnp.float32)

    params = {
        # 1x1 conv weights stored pre-transposed: (in_ch, out_ch)
        "wq_t": 0.1 * jax.random.normal(keys[1], (C, Cq), jnp.float32),
        "bq": 0.1 * jax.random.normal(keys[2], (1, Cq), jnp.float32),
        "wk_t": 0.1 * jax.random.normal(keys[3], (C, Cq), jnp.float32),
        "bk": 0.1 * jax.random.normal(keys[4], (1, Cq), jnp.float32),
        "wv_t": 0.1 * jax.random.normal(keys[5], (C, C), jnp.float32),
        "bv": 0.1 * jax.random.normal(keys[6], (1, C), jnp.float32),
        "gamma": jnp.full((1, 1), 0.5, jnp.float32),      # nonzero so attention contributes
        "wfc_t": 0.1 * jax.random.normal(keys[7], (P, num_heads), jnp.float32),
        "bfc": 0.1 * jax.random.normal(keys[8], (1, num_heads), jnp.float32),
    }

    out = multiple_self_attention(x, params, num_heads)
    out = jax.block_until_ready(out)

    ref = reference_forward(x, params, num_heads)
    assert out.shape == (B, ch, H, W)
    assert bool(jnp.allclose(out, ref, rtol=1e-4, atol=1e-4)), "mismatch vs reference"
    print("KERNEL_OK")
</pallas_src>

<mosaic_0001>
module attributes {stable_mosaic.version = 11 : i64} {
  func.func @_fused_attention_kernel(%arg0: i32, %arg1: memref<1x4x256xf32, #tpu.memory_space<vmem>>, %arg2: memref<4x4xf32, #tpu.memory_space<vmem>>, %arg3: memref<4x1xf32, #tpu.memory_space<vmem>>, %arg4: memref<1x4x4xf32, #tpu.memory_space<vmem>>, %arg5: memref<1x4x1xf32, #tpu.memory_space<vmem>>, %arg6: memref<1x4x1xf32, #tpu.memory_space<vmem>>, %arg7: memref<1x4x256xf32, #tpu.memory_space<vmem>>) attributes {dimension_semantics = [#tpu.dimension_semantics<parallel>], iteration_bounds = array<i64: 2>, scalar_prefetch = 0 : i64, scratch_operands = 0 : i64, tpu.core_type = #tpu.core_type<tc>, window_params = [{transform_indices = @transform_0, window_bounds = array<i64: 1, 4, 256>}, {pipeline_mode = #tpu.pipeline_mode<synchronous>, transform_indices = @transform_1, window_bounds = array<i64: 4, 4>}, {pipeline_mode = #tpu.pipeline_mode<synchronous>, transform_indices = @transform_2, window_bounds = array<i64: 4, 1>}, {transform_indices = @transform_3, window_bounds = array<i64: 1, 4, 4>}, {transform_indices = @transform_4, window_bounds = array<i64: 1, 4, 1>}, {transform_indices = @transform_5, window_bounds = array<i64: 1, 4, 1>}, {transform_indices = @transform_6, window_bounds = array<i64: 1, 4, 256>}]} {
    %c0 = arith.constant 0 : index
    %c0_0 = arith.constant 0 : index
    %c0_1 = arith.constant 0 : index
    %0 = vector.load %arg1[%c0, %c0_0, %c0_1] : memref<1x4x256xf32, #tpu.memory_space<vmem>>, vector<1x4x256xf32>
    %1 = vector.shape_cast %0 : vector<1x4x256xf32> to vector<4x256xf32>
    %c0_2 = arith.constant 0 : index
    %c0_3 = arith.constant 0 : index
    %2 = vector.load %arg2[%c0_2, %c0_3] : memref<4x4xf32, #tpu.memory_space<vmem>>, vector<4x4xf32>
    %cst = arith.constant dense<0.000000e+00> : vector<4x256xf32>
    %3 = tpu.matmul %2, %1, %cst {dimension_numbers = #tpu.dot_dimension_numbers<[1], [0], [0], [1], [0, 0, 1, 1], [], []>} : vector<4x4xf32>, vector<4x256xf32>, vector<4x256xf32> -> vector<4x256xf32>
    %c0_4 = arith.constant 0 : index
    %c0_5 = arith.constant 0 : index
    %4 = vector.load %arg3[%c0_4, %c0_5] : memref<4x1xf32, #tpu.memory_space<vmem>>, vector<4x1xf32>
    %5 = vector.broadcast %4 : vector<4x1xf32> to vector<4x256xf32>
    %6 = arith.addf %3, %5 : vector<4x256xf32>
    %cst_6 = arith.constant dense<0.000000e+00> : vector<256x256xf32>
    %7 = tpu.matmul %1, %6, %cst_6 {dimension_numbers = #tpu.dot_dimension_numbers<[0], [0], [1], [1], [0, 1, 1, 1], [], []>} : vector<4x256xf32>, vector<4x256xf32>, vector<256x256xf32> -> vector<256x256xf32>
    %cst_7 = arith.constant dense<0xFF800000> : vector<256xf32>
    %8 = vector.multi_reduction <maximumf>, %7, %cst_7 [0] : vector<256x256xf32> to vector<256xf32>
    %9 = vector.shape_cast %8 : vector<256xf32> to vector<1x256xf32>
    %10 = vector.broadcast %9 : vector<1x256xf32> to vector<256x256xf32>
    %11 = arith.subf %7, %10 : vector<256x256xf32>
    %12 = math.exp %11 : vector<256x256xf32>
    %cst_8 = arith.constant dense<0.000000e+00> : vector<256xf32>
    %13 = vector.multi_reduction <add>, %12, %cst_8 [0] : vector<256x256xf32> to vector<256xf32>
    %14 = vector.shape_cast %13 : vector<256xf32> to vector<1x256xf32>
    %c0_9 = arith.constant 0 : index
    %c0_10 = arith.constant 0 : index
    %c0_11 = arith.constant 0 : index
    %15 = vector.load %arg4[%c0_9, %c0_10, %c0_11] : memref<1x4x4xf32, #tpu.memory_space<vmem>>, vector<1x4x4xf32>
    %16 = vector.shape_cast %15 : vector<1x4x4xf32> to vector<4x4xf32>
    %cst_12 = arith.constant dense<0.000000e+00> : vector<4x256xf32>
    %17 = tpu.matmul %16, %1, %cst_12 {dimension_numbers = #tpu.dot_dimension_numbers<[1], [0], [0], [1], [0, 0, 1, 1], [], []>} : vector<4x4xf32>, vector<4x256xf32>, vector<4x256xf32> -> vector<4x256xf32>
    %c0_13 = arith.constant 0 : index
    %c0_14 = arith.constant 0 : index
    %c0_15 = arith.constant 0 : index
    %18 = vector.load %arg5[%c0_13, %c0_14, %c0_15] : memref<1x4x1xf32, #tpu.memory_space<vmem>>, vector<1x4x1xf32>
    %19 = vector.shape_cast %18 : vector<1x4x1xf32> to vector<4x1xf32>
    %20 = vector.broadcast %19 : vector<4x1xf32> to vector<4x256xf32>
    %21 = arith.addf %17, %20 : vector<4x256xf32>
    %cst_16 = arith.constant dense<0.000000e+00> : vector<4x256xf32>
    %22 = tpu.matmul %21, %12, %cst_16 {dimension_numbers = #tpu.dot_dimension_numbers<[1], [0], [0], [1], [0, 0, 1, 1], [], []>} : vector<4x256xf32>, vector<256x256xf32>, vector<4x256xf32> -> vector<4x256xf32>
    %23 = vector.broadcast %14 : vector<1x256xf32> to vector<4x256xf32>
    %24 = arith.divf %22, %23 : vector<4x256xf32>
    %c0_17 = arith.constant 0 : index
    %c0_18 = arith.constant 0 : index
    %c0_19 = arith.constant 0 : index
    %25 = vector.load %arg6[%c0_17, %c0_18, %c0_19] : memref<1x4x1xf32, #tpu.memory_space<vmem>>, vector<1x4x1xf32>
    %26 = vector.shape_cast %25 : vector<1x4x1xf32> to vector<4x1xf32>
    %27 = vector.broadcast %26 : vector<4x1xf32> to vector<4x256xf32>
    %28 = arith.mulf %27, %1 : vector<4x256xf32>
    %29 = arith.addf %24, %28 : vector<4x256xf32>
    %c0_20 = arith.constant 0 : index
    %c0_21 = arith.constant 0 : index
    %c0_22 = arith.constant 0 : index
    %30 = vector.load %arg7[%c0_20, %c0_21, %c0_22] : memref<1x4x256xf32, #tpu.memory_space<vmem>>, vector<1x4x256xf32>
    %31 = vector.shape_cast %30 : vector<1x4x256xf32> to vector<4x256xf32>
    %32 = vector.shape_cast %29 : vector<4x256xf32> to vector<1x4x256xf32>
    tpu.vector_store %arg7[%c0_20, %c0_21, %c0_22], %32 {strides = array<i32>} : memref<1x4x256xf32, #tpu.memory_space<vmem>>, vector<1x4x256xf32>,
    return
  }
  func.func @transform_0(%arg0: i32) -> (i32, i32, i32) {
    %c0_i32 = arith.constant 0 : i32
    %c0_i32_0 = arith.constant 0 : i32
    %c0_i32_1 = arith.constant 0 : i32
    return %arg0, %c0_i32, %c0_i32_0 : i32, i32, i32
  }
  func.func @transform_1(%arg0: i32) -> (i32, i32) {
    %c0_i32 = arith.constant 0 : i32
    %c0_i32_0 = arith.constant 0 : i32
    %c0_i32_1 = arith.constant 0 : i32
    return %c0_i32, %c0_i32_0 : i32, i32
  }
  func.func @transform_2(%arg0: i32) -> (i32, i32) {
    %c0_i32 = arith.constant 0 : i32
    %c0_i32_0 = arith.constant 0 : i32
    %c0_i32_1 = arith.constant 0 : i32
    return %c0_i32, %c0_i32_0 : i32, i32
  }
  func.func @transform_3(%arg0: i32) -> (i32, i32, i32) {
    %c0_i32 = arith.constant 0 : i32
    %c0_i32_0 = arith.constant 0 : i32
    %c0_i32_1 = arith.constant 0 : i32
    return %arg0, %c0_i32, %c0_i32_0 : i32, i32, i32
  }
  func.func @transform_4(%arg0: i32) -> (i32, i32, i32) {
    %c0_i32 = arith.constant 0 : i32
    %c0_i32_0 = arith.constant 0 : i32
    %c0_i32_1 = arith.constant 0 : i32
    return %arg0, %c0_i32, %c0_i32_0 : i32, i32, i32
  }
  func.func @transform_5(%arg0: i32) -> (i32, i32, i32) {
    %c0_i32 = arith.constant 0 : i32
    %c0_i32_0 = arith.constant 0 : i32
    %c0_i32_1 = arith.constant 0 : i32
    return %arg0, %c0_i32, %c0_i32_0 : i32, i32, i32
  }
  func.func @transform_6(%arg0: i32) -> (i32, i32, i32) {
    %c0_i32 = arith.constant 0 : i32
    %c0_i32_0 = arith.constant 0 : i32
    %c0_i32_1 = arith.constant 0 : i32
    return %arg0, %c0_i32, %c0_i32_0 : i32, i32, i32
  }
}

</mosaic_0001>

<llo_original>
// kernel: tpu_custom_call.1
$region0: #{tpu_custom_call.1}
  #allocation0 [shape = 'u32[]', space=smem, size = 0x4, offset = 0x4, fixed_abs, tag = 'smem constant byte address 0x4 - core index']
  #allocation1 [shape = 'u32[72,128]{1,0:T(1,128)}', space=vmem, size = 0x9000, scoped, tag = 'internal scratch']
  %s0 = inlined_call_operand.vmem [shape: f32[2,4,256], index: 0, kind: input, shape index: {}]
  %s1 = inlined_call_operand.vmem [shape: f32[4,4], index: 1, kind: input, shape index: {}]
  %s2 = inlined_call_operand.vmem [shape: f32[4,1], index: 2, kind: input, shape index: {}]
  %s3 = inlined_call_operand.hbm [shape: f32[2,4,4], index: 3, kind: input, shape index: {}]
  %s4 = inlined_call_operand.vmem [shape: f32[2,4,1], index: 4, kind: input, shape index: {}]
  %s5 = inlined_call_operand.vmem [shape: f32[2,4,1], index: 5, kind: input, shape index: {}]
  %s6 = inlined_call_operand.hbm [shape: f32[2,4,256], index: 6, kind: output, shape index: {}]
  %s7 = sld [smem:[#allocation0]]
  $region61: #{tpu_custom_call.1} parent=0
    _
  %s9 = ssub.s32 1, %s7
  %s10 = scalar_select 0, %s9, %s7
  $region1: #{tpu_custom_call.1} parent=0
    #allocation2 [shape = 'u8[4096]{0}', space=vmem, size = 0x1000, scoped, tag = 'input window, operand 3']
    #allocation3 [shape = 's32[2]{0}', space=sflag, size = 0x8, scoped, tag = 'scoped memory for tpu_custom_call.1']
    #allocation4 [shape = 's32[2]{0}', space=sflag, size = 0x8, scoped, tag = 'scoped memory for tpu_custom_call.1']
    #allocation5 [shape = 'u8[8192]{0}', space=vmem, size = 0x2000, scoped, tag = 'output window, operand 0']
    %11 = vsyncpa [#allocation3], 0
    %s12 = scalar_lea.sflag [#allocation3], 1
    %13 = vsyncpa %s12, 0
    %14 = vsyncpa [#allocation4], 0
    %s15 = scalar_lea.sflag [#allocation4], 1
    %16 = vsyncpa %s15, 0
    loop: start=0, step=1, limit=4
    $region2: #{tpu_custom_call.1} parent=1 // loop_pre_header
      _
    $region3: #{tpu_custom_call.1} parent=1 // loop_header
      %s18 = sphi 0, %s22
      %p19 = scmp.ge.s32.totalorder %s18, 4
      %s28 = sphi 0, %s30
      %s31 = sphi 0, %s28
      %s32 = sphi 0, %s31
      %s48 = sphi 0, %s32
      %s52 = sphi 0, %s52
      %s54 = sphi 0, %s52
      %s55 = sphi 0, %s54
      %s69 = sphi 0, %s55
      %s73 = sphi 0, %s73
      %s75 = sphi 0, %s73
      %s76 = sphi 0, %s75
      %s90 = sphi 0, %s76
      %s96 = sphi 0, %s98
      %s99 = sphi 0, %s96
      %s100 = sphi 0, %s99
      %s116 = sphi 0, %s100
      %s122 = sphi 0, %s124
      %s125 = sphi 0, %s122
      %s126 = sphi 0, %s125
      %s142 = sphi 0, %s126
      %s148 = sphi 0, %s150
      %s151 = sphi 0, %s148
      %s152 = sphi 0, %s151
      %s168 = sphi 0, %s152
      %s174 = sphi 0, %s176
      %s177 = sphi 0, %s174
      %s178 = sphi 0, %s177
      %s194 = sphi 0, %s178
    $region4: #{tpu_custom_call.1} parent=1 // loop_header_branch
      %21 = sbr.rel (%p19) target = $region8
    $region5: #{tpu_custom_call.1} parent=1 // loop_body
      %s23 = ssub.s32 %s18, 1
      %s24 = ssub.s32 %s18, 2
      %s25 = sadd.s32 %s18, 1
      %s26 = ssub.s32 %s18, %s25
      %p27 = scmp.eq.s32.totalorder %s26, 0
      %s29 = sadd.s32 %s28, 1
      %s30 = scalar_select %p27, %s28, %s29
      %p33 = pneg %p27
      %p34 = scmp.eq.s32.totalorder %s18, 1
      %p35 = por %p33, %p34
      %p36 = scmp.ne.s32.totalorder %s28, %s31
      %p37 = scmp.eq.s32.totalorder %s18, 0
      %p38 = por %p36, %p37
      %p39 = scmp.ne.s32.totalorder %s28, %s31
      %p40 = scmp.eq.s32.totalorder %s23, 1
      %p41 = por %p39, %p40
      %p42 = scmp.ne.s32.totalorder %s31, %s32
      %p43 = scmp.eq.s32.totalorder %s23, 0
      %p44 = por %p42, %p43
      %p45 = scmp.ne.s32.totalorder %s31, %s32
      %p46 = scmp.eq.s32.totalorder %s24, 1
      %p47 = por %p45, %p46
      %p49 = scmp.ne.s32.totalorder %s32, %s48
      %p50 = scmp.eq.s32.totalorder %s24, 0
      %p51 = por %p49, %p50
      %s53 = sadd.s32 %s52, 1
      %p56 = scmp.eq.s32.totalorder %s18, 1
      %p57 = scmp.ne.s32.totalorder %s52, %s54
      %p58 = scmp.eq.s32.totalorder %s18, 0
      %p59 = por %p57, %p58
      %p60 = scmp.ne.s32.totalorder %s52, %s54
      %p61 = scmp.eq.s32.totalorder %s23, 1
      %p62 = por %p60, %p61
      %p63 = scmp.ne.s32.totalorder %s54, %s55
      %p64 = scmp.eq.s32.totalorder %s23, 0
      %p65 = por %p63, %p64
      %p66 = scmp.ne.s32.totalorder %s54, %s55
      %p67 = scmp.eq.s32.totalorder %s24, 1
      %p68 = por %p66, %p67
      %p70 = scmp.ne.s32.totalorder %s55, %s69
      %p71 = scmp.eq.s32.totalorder %s24, 0
      %p72 = por %p70, %p71
      %s74 = sadd.s32 %s73, 1
      %p77 = scmp.eq.s32.totalorder %s18, 1
      %p78 = scmp.ne.s32.totalorder %s73, %s75
      %p79 = scmp.eq.s32.totalorder %s18, 0
      %p80 = por %p78, %p79
      %p81 = scmp.ne.s32.totalorder %s73, %s75
      %p82 = scmp.eq.s32.totalorder %s23, 1
      %p83 = por %p81, %p82
      %p84 = scmp.ne.s32.totalorder %s75, %s76
      %p85 = scmp.eq.s32.totalorder %s23, 0
      %p86 = por %p84, %p85
      %p87 = scmp.ne.s32.totalorder %s75, %s76
      %p88 = scmp.eq.s32.totalorder %s24, 1
      %p89 = por %p87, %p88
      %p91 = scmp.ne.s32.totalorder %s76, %s90
      %p92 = scmp.eq.s32.totalorder %s24, 0
      %p93 = por %p91, %p92
      %s94 = ssub.s32 %s18, %s25
      %p95 = scmp.eq.s32.totalorder %s94, 0
      %s97 = sadd.s32 %s96, 1
      %s98 = scalar_select %p95, %s96, %s97
      %p101 = pneg %p95
      %p102 = scmp.eq.s32.totalorder %s18, 1
      %p103 = por %p101, %p102
      %p104 = scmp.ne.s32.totalorder %s96, %s99
      %p105 = scmp.eq.s32.totalorder %s18, 0
      %p106 = por %p104, %p105
      %p107 = scmp.ne.s32.totalorder %s96, %s99
      %p108 = scmp.eq.s32.totalorder %s23, 1
      %p109 = por %p107, %p108
      %p110 = scmp.ne.s32.totalorder %s99, %s100
      %p111 = scmp.eq.s32.totalorder %s23, 0
      %p112 = por %p110, %p111
      %p113 = scmp.ne.s32.totalorder %s99, %s100
      %p114 = scmp.eq.s32.totalorder %s24, 1
      %p115 = por %p113, %p114
      %p117 = scmp.ne.s32.totalorder %s100, %s116
      %p118 = scmp.eq.s32.totalorder %s24, 0
      %p119 = por %p117, %p118
      %s120 = ssub.s32 %s18, %s25
      %p121 = scmp.eq.s32.totalorder %s120, 0
      %s123 = sadd.s32 %s122, 1
      %s124 = scalar_select %p121, %s122, %s123
      %p127 = pneg %p121
      %p128 = scmp.eq.s32.totalorder %s18, 1
      %p129 = por %p127, %p128
      %p130 = scmp.ne.s32.totalorder %s122, %s125
      %p131 = scmp.eq.s32.totalorder %s18, 0
      %p132 = por %p130, %p131
      %p133 = scmp.ne.s32.totalorder %s122, %s125
      %p134 = scmp.eq.s32.totalorder %s23, 1
      %p135 = por %p133, %p134
      %p136 = scmp.ne.s32.totalorder %s125, %s126
      %p137 = scmp.eq.s32.totalorder %s23, 0
      %p138 = por %p136, %p137
      %p139 = scmp.ne.s32.totalorder %s125, %s126
      %p140 = scmp.eq.s32.totalorder %s24, 1
      %p141 = por %p139, %p140
      %p143 = scmp.ne.s32.totalorder %s126, %s142
      %p144 = scmp.eq.s32.totalorder %s24, 0
      %p145 = por %p143, %p144
      %s146 = ssub.s32 %s18, %s25
      %p147 = scmp.eq.s32.totalorder %s146, 0
      %s149 = sadd.s32 %s148, 1
      %s150 = scalar_select %p147, %s148, %s149
      %p153 = pneg %p147
      %p154 = scmp.eq.s32.totalorder %s18, 1
      %p155 = por %p153, %p154
      %p156 = scmp.ne.s32.totalorder %s148, %s151
      %p157 = scmp.eq.s32.totalorder %s18, 0
      %p158 = por %p156, %p157
      %p159 = scmp.ne.s32.totalorder %s148, %s151
      %p160 = scmp.eq.s32.totalorder %s23, 1
      %p161 = por %p159, %p160
      %p162 = scmp.ne.s32.totalorder %s151, %s152
      %p163 = scmp.eq.s32.totalorder %s23, 0
      %p164 = por %p162, %p163
      %p165 = scmp.ne.s32.totalorder %s151, %s152
      %p166 = scmp.eq.s32.totalorder %s24, 1
      %p167 = por %p165, %p166
      %p169 = scmp.ne.s32.totalorder %s152, %s168
      %p170 = scmp.eq.s32.totalorder %s24, 0
      %p171 = por %p169, %p170
      %s172 = ssub.s32 %s18, %s25
      %p173 = scmp.eq.s32.totalorder %s172, 0
      %s175 = sadd.s32 %s174, 1
      %s176 = scalar_select %p173, %s174, %s175
      %p179 = pneg %p173
      %p180 = scmp.eq.s32.totalorder %s18, 1
      %p181 = por %p179, %p180
      %p182 = scmp.ne.s32.totalorder %s174, %s177
      %p183 = scmp.eq.s32.totalorder %s18, 0
      %p184 = por %p182, %p183
      %p185 = scmp.ne.s32.totalorder %s174, %s177
      %p186 = scmp.eq.s32.totalorder %s23, 1
      %p187 = por %p185, %p186
      %p188 = scmp.ne.s32.totalorder %s177, %s178
      %p189 = scmp.eq.s32.totalorder %s23, 0
      %p190 = por %p188, %p189
      %p191 = scmp.ne.s32.totalorder %s177, %s178
      %p192 = scmp.eq.s32.totalorder %s24, 1
      %p193 = por %p191, %p192
      %p195 = scmp.ne.s32.totalorder %s178, %s194
      %p196 = scmp.eq.s32.totalorder %s24, 0
      %p197 = por %p195, %p196
      %p198 = scmp.le.s32.totalorder 1, %s18
      %p199 = scmp.lt.s32.totalorder %s18, 3
      %p200 = pnand %p198, %p199
      %p201 = pneg %p200
      // Predicated region
      $region9: #{tpu_custom_call.1} parent=5 // pred_check
        _
      $region10: #{tpu_custom_call.1} parent=5 // pred_check_branch
        %203 = sbr.rel (%p200) target = $region12
      $region11: #{tpu_custom_call.1} parent=5 // pred_region
        %s204 = ssub.s32 %s18, 1
        // Predicated region
        $region13: #{tpu_custom_call.1} parent=11 // pred_check
          %p205 = pneg %p65
        $region14: #{tpu_custom_call.1} parent=11 // pred_check_branch
          %207 = sbr.rel (%p205) target = $region16
        $region15: #{tpu_custom_call.1} parent=11 // pred_region
          _
        $region16: #{tpu_custom_call.1} parent=11 // pred_fallthru
          _
        // Predicated region
        $region17: #{tpu_custom_call.1} parent=11 // pred_check
          %p208 = pneg %p86
        $region18: #{tpu_custom_call.1} parent=11 // pred_check_branch
          %210 = sbr.rel (%p208) target = $region20
        $region19: #{tpu_custom_call.1} parent=11 // pred_region
          _
        $region20: #{tpu_custom_call.1} parent=11 // pred_fallthru
          _
      $region12: #{tpu_custom_call.1} parent=5 // pred_fallthru
        _
      %p211 = scmp.lt.s32.totalorder %s18, 2
      // Predicated region
      $region21: #{tpu_custom_call.1} parent=5 // pred_check
        %p212 = pneg %p211
      $region22: #{tpu_custom_call.1} parent=5 // pred_check_branch
        %214 = sbr.rel (%p212) target = $region24
      $region23: #{tpu_custom_call.1} parent=5 // pred_region
        // Predicated region
        $region25: #{tpu_custom_call.1} parent=23 // pred_check
          %p215 = pneg %p38
        $region26: #{tpu_custom_call.1} parent=23 // pred_check_branch
          %217 = sbr.rel (%p215) target = $region28
        $region27: #{tpu_custom_call.1} parent=23 // pred_region
          %p218 = scmp.lt.s32.totalorder %s18, 1
          %s219 = scalar_select %p218, %s18, 1
          %s220 = smul.addr %s219, 2
          %s221 = smul.addr %s220, 4
          %s222 = scalar_lea.vmem %s0, %s221
        $region28: #{tpu_custom_call.1} parent=23 // pred_fallthru
          _
        // Predicated region
        $region29: #{tpu_custom_call.1} parent=23 // pred_check
          %p223 = pneg %p106
        $region30: #{tpu_custom_call.1} parent=23 // pred_check_branch
          %225 = sbr.rel (%p223) target = $region32
        $region31: #{tpu_custom_call.1} parent=23 // pred_region
          %s226 = sand.u32 %s96, 1
          %s227 = scalar_lea.sflag [#allocation3], %s226
          %s228 = sand.u32 %s96, 1
          %s229 = smul.addr %s228, 4
          %s230 = scalar_lea.vmem [#allocation2], %s229
          %232 = vsyncadd %s227, 0
          %s233 = smul.addr %s18, 4
          %s234 = scalar_lea.hbm %s3, %s233
          %s236 = sshll.u32 %s234, 4
          %s237 = int_to_ptr.hbm [resolvable:$true] %s236
          %s238 = sshll.u32 %s230, 4
          %s239 = int_to_ptr.vmem [resolvable:$true] %s238
          %241 = dma.hbm_to_vmem [thread:$0]  %s237, 64, %s239, %s227
        $region32: #{tpu_custom_call.1} parent=23 // pred_fallthru
          _
        // Predicated region
        $region33: #{tpu_custom_call.1} parent=23 // pred_check
          %p242 = pneg %p132
        $region34: #{tpu_custom_call.1} parent=23 // pred_check_branch
          %244 = sbr.rel (%p242) target = $region36
        $region35: #{tpu_custom_call.1} parent=23 // pred_region
          %p245 = scmp.lt.s32.totalorder %s18, 1
          %s246 = scalar_select %p245, %s18, 1
          %s247 = smul.addr %s246, 4
          %s248 = scalar_lea.vmem %s4, %s247
        $region36: #{tpu_custom_call.1} parent=23 // pred_fallthru
          _
        // Predicated region
        $region37: #{tpu_custom_call.1} parent=23 // pred_check
          %p249 = pneg %p158
        $region38: #{tpu_custom_call.1} parent=23 // pred_check_branch
          %251 = sbr.rel (%p249) target = $region40
        $region39: #{tpu_custom_call.1} parent=23 // pred_region
          %p252 = scmp.lt.s32.totalorder %s18, 1
          %s253 = scalar_select %p252, %s18, 1
          %s254 = smul.addr %s253, 4
          %s255 = scalar_lea.vmem %s5, %s254
        $region40: #{tpu_custom_call.1} parent=23 // pred_fallthru
          _
      $region24: #{tpu_custom_call.1} parent=5 // pred_fallthru
        _
      %p256 = scmp.le.s32.totalorder 1, %s18
      %p257 = scmp.lt.s32.totalorder %s18, 3
      %p258 = pnand %p256, %p257
      %p259 = pneg %p258
      // Predicated region
      $region41: #{tpu_custom_call.1} parent=5 // pred_check
        _
      $region42: #{tpu_custom_call.1} parent=5 // pred_check_branch
        %261 = sbr.rel (%p258) target = $region44
      $region43: #{tpu_custom_call.1} parent=5 // pred_region
        %s262 = ssub.s32 %s18, 1
        %s263 = sand.u32 %s99, 1
        %s264 = scalar_lea.sflag [#allocation3], %s263
        %s265 = sand.u32 %s99, 1
        %s266 = smul.addr %s265, 4
        %s267 = scalar_lea.vmem [#allocation2], %s266
        // Predicated region
        $region45: #{tpu_custom_call.1} parent=43 // pred_check
          %p268 = pneg %p112
        $region46: #{tpu_custom_call.1} parent=43 // pred_check_branch
          %270 = sbr.rel (%p268) target = $region48
        $region47: #{tpu_custom_call.1} parent=43 // pred_region
          %272 = dma.done %s264, 64
        $region48: #{tpu_custom_call.1} parent=43 // pred_fallthru
          _
        %p273 = scmp.lt.s32.totalorder %s23, 1
        %s274 = scalar_select %p273, %s23, 1
        %s275 = smul.addr %s274, 2
        %s276 = smul.addr %s275, 4
        %s277 = scalar_lea.vmem %s0, %s276
        %p278 = pneg %p44
        %p279 = pneg %p41
        %p280 = pneg %p65
        %p281 = pneg %p62
        %p282 = pneg %p86
        %p283 = pneg %p83
        %s284 = sand.u32 %s99, 1
        %s285 = scalar_lea.sflag [#allocation3], %s284
        %s286 = sand.u32 %s99, 1
        %s287 = smul.addr %s286, 4
        %s288 = scalar_lea.vmem [#allocation2], %s287
        %p289 = pneg %p112
        %p290 = pneg %p109
        %p291 = scmp.lt.s32.totalorder %s23, 1
        %s292 = scalar_select %p291, %s23, 1
        %s293 = smul.addr %s292, 4
        %s294 = scalar_lea.vmem %s4, %s293
        %p295 = pneg %p138
        %p296 = pneg %p135
        %p297 = scmp.lt.s32.totalorder %s23, 1
        %s298 = scalar_select %p297, %s23, 1
        %s299 = smul.addr %s298, 4
        %s300 = scalar_lea.vmem %s5, %s299
        %p301 = pneg %p164
        %p302 = pneg %p161
        %p303 = pneg %p190
        %p304 = pneg %p187
        %s305 = sand.u32 %s177, 1
        %s306 = scalar_lea.sflag [#allocation4], %s305
        %s307 = sand.u32 %s177, 1
        %s308 = smul.addr %s307, 8
        %s309 = scalar_lea.vmem [#allocation5], %s308
        %p310 = scmp.lt.s32.totalorder %s23, 1
        %s311 = scalar_select %p310, %s23, 1
        %s312 = smul.addr %s311, 2
        %s313 = smul.addr %s312, 4
        %s314 = scalar_lea.vmem %s0, %s313
        %p315 = scmp.lt.s32.totalorder %s23, 1
        %s316 = scalar_select %p315, %s23, 1
        %s317 = smul.addr %s316, 4
        %s318 = scalar_lea.vmem %s4, %s317
        %p319 = scmp.lt.s32.totalorder %s23, 1
        %s320 = scalar_select %p319, %s23, 1
        %s321 = smul.addr %s320, 4
        %s322 = scalar_lea.vmem %s5, %s321
        %v323 = vld [vmem:[%s314] sm:$0xff]
        %v324 = vld [vmem:[%s1] sm:$0xf]
        %v325 = vld [vmem:[%s2] sm:$0xf]
        %327 = vset.pattern.permute.xlu0 0
        %328 = vperm.xlu0 %327, %v325
        %v329 = vpop.permute.xlu0 %328
        %332 = vst [vmem:[#allocation1] ss:$2 sm:$0xff] %v323
        %v333 = vld.sshfl [vmem:[#allocation1] sm:$0xff pattern:$0x75316420]
        %v334 = vld.sshfl [vmem:[#allocation1 + $0x8] sm:$0xff pattern:$0x75316420]
        %vm335 = vcmask 31744
        %v337 = vsel %vm335, %v324, 0
        %vm339 = vcmask 1043456
        %v340 = vsel %vm339, %v333, 0
        %v342 = vsel %vm339, %v334, 0
        %344 = vmatpush.msra.mxu0 0.0
        %345 = vmatpush.msra.mxu0 0.0
        %346 = vmatpush.msra.mxu0 0.0
        %347 = vmatpush.msra.mxu0 0.0
        %348 = vmatpush.msra.mxu0 0.0
        %349 = vmatpush.msra.mxu0 0.0
        %350 = vmatpush.msra.mxu0 0.0
        %351 = vmatpush.msra.mxu0 0.0
        %352 = vmatpush.msra.mxu0 0.0
        %353 = vmatpush.msra.mxu0 0.0
        %354 = vmatpush.msra.mxu0 0.0
        %355 = vmatpush.msra.mxu0 0.0
        %356 = vmatpush.msra.mxu0 0.0
        %357 = vmatpush.msra.mxu0 0.0
        %358 = vmatpush.msra.mxu0 0.0
        %359 = vmatpush.msra.mxu0 %v340
        %360 = vmatmul.f32.gmra.mxu0 %v337
        %v361 = vpop.f32.mrf.mxu0
        %v362 = vadd.f32 %v329, %v361
        %363 = vdwg.mxu0
        %364 = vmatpush.msra.mxu0 0.0
        %365 = vmatpush.msra.mxu0 0.0
        %366 = vmatpush.msra.mxu0 0.0
        %367 = vmatpush.msra.mxu0 0.0
        %368 = vmatpush.msra.mxu0 0.0
        %369 = vmatpush.msra.mxu0 0.0
        %370 = vmatpush.msra.mxu0 0.0
        %371 = vmatpush.msra.mxu0 0.0
        %372 = vmatpush.msra.mxu0 0.0
        %373 = vmatpush.msra.mxu0 0.0
        %374 = vmatpush.msra.mxu0 0.0
        %375 = vmatpush.msra.mxu0 0.0
        %376 = vmatpush.msra.mxu0 0.0
        %377 = vmatpush.msra.mxu0 0.0
        %378 = vmatpush.msra.mxu0 0.0
        %379 = vmatpush.msra.mxu0 %v342
        %380 = vmatmul.f32.gmra.mxu0 %v337
        %v381 = vpop.f32.mrf.mxu0
        %v382 = vadd.f32 %v329, %v381
        %383 = vdwg.mxu0
        %384 = vst [vmem:[#allocation1] ss:$2 sm:$0xff] %v323
        %v385 = vld.sshfl [vmem:[#allocation1] sm:$0xff pattern:$0x75316420]
        %v386 = vld.sshfl [vmem:[#allocation1 + $0x8] sm:$0xff pattern:$0x75316420]
        %389 = vxpose.xlu0.b32.start [1/16] %v385, 128
        %390 = vxpose.xlu0.b32.cont [2/16] 0.0, 128
        %391 = vxpose.xlu0.b32.cont [3/16] 0.0, 128
        %392 = vxpose.xlu0.b32.cont [4/16] 0.0, 128
        %393 = vxpose.xlu0.b32.cont [5/16] 0.0, 128
        %394 = vxpose.xlu0.b32.cont [6/16] 0.0, 128
        %395 = vxpose.xlu0.b32.cont [7/16] 0.0, 128
        %396 = vxpose.xlu0.b32.cont [8/16] 0.0, 128
        %397 = vxpose.xlu0.b32.cont [9/16] 0.0, 128
        %398 = vxpose.xlu0.b32.cont [10/16] 0.0, 128
        %399 = vxpose.xlu0.b32.cont [11/16] 0.0, 128
        %400 = vxpose.xlu0.b32.cont [12/16] 0.0, 128
        %401 = vxpose.xlu0.b32.cont [13/16] 0.0, 128
        %402 = vxpose.xlu0.b32.cont [14/16] 0.0, 128
        %403 = vxpose.xlu0.b32.cont [15/16] 0.0, 128
        %404 = vxpose.xlu0.b32.end [16/16] 0.0, 128
        %v405 = vpop.trf.xlu0
        %v406 = vpop.trf.xlu0
        %v407 = vpop.trf.xlu0
        %v408 = vpop.trf.xlu0
        %v409 = vpop.trf.xlu0
        %v410 = vpop.trf.xlu0
        %v411 = vpop.trf.xlu0
        %v412 = vpop.trf.xlu0
        %v413 = vpop.trf.xlu0
        %v414 = vpop.trf.xlu0
        %v415 = vpop.trf.xlu0
        %v416 = vpop.trf.xlu0
        %v417 = vpop.trf.xlu0
        %v418 = vpop.trf.xlu0
        %v419 = vpop.trf.xlu0
        %v420 = vpop.trf.xlu0
        %421 = vxpose.xlu0.b32.start [1/16] %v386, 128
        %422 = vxpose.xlu0.b32.cont [2/16] 0.0, 128
        %423 = vxpose.xlu0.b32.cont [3/16] 0.0, 128
        %424 = vxpose.xlu0.b32.cont [4/16] 0.0, 128
        %425 = vxpose.xlu0.b32.cont [5/16] 0.0, 128
        %426 = vxpose.xlu0.b32.cont [6/16] 0.0, 128
        %427 = vxpose.xlu0.b32.cont [7/16] 0.0, 128
        %428 = vxpose.xlu0.b32.cont [8/16] 0.0, 128
        %429 = vxpose.xlu0.b32.cont [9/16] 0.0, 128
        %430 = vxpose.xlu0.b32.cont [10/16] 0.0, 128
        %431 = vxpose.xlu0.b32.cont [11/16] 0.0, 128
        %432 = vxpose.xlu0.b32.cont [12/16] 0.0, 128
        %433 = vxpose.xlu0.b32.cont [13/16] 0.0, 128
        %434 = vxpose.xlu0.b32.cont [14/16] 0.0, 128
        %435 = vxpose.xlu0.b32.cont [15/16] 0.0, 128
        %436 = vxpose.xlu0.b32.end [16/16] 0.0, 128
        %v437 = vpop.trf.xlu0
        %v438 = vpop.trf.xlu0
        %v439 = vpop.trf.xlu0
        %v440 = vpop.trf.xlu0
        %v441 = vpop.trf.xlu0
        %v442 = vpop.trf.xlu0
        %v443 = vpop.trf.xlu0
        %v444 = vpop.trf.xlu0
        %v445 = vpop.trf.xlu0
        %v446 = vpop.trf.xlu0
        %v447 = vpop.trf.xlu0
        %v448 = vpop.trf.xlu0
        %v449 = vpop.trf.xlu0
        %v450 = vpop.trf.xlu0
        %v451 = vpop.trf.xlu0
        %v452 = vpop.trf.xlu0
        %v454 = vsel %vm335, %v405, 0
        %v457 = vsel %vm335, %v406, 0
        %v460 = vsel %vm335, %v407, 0
        %v463 = vsel %vm335, %v408, 0
        %v466 = vsel %vm335, %v409, 0
        %v469 = vsel %vm335, %v410, 0
        %v472 = vsel %vm335, %v411, 0
        %v475 = vsel %vm335, %v412, 0
        %v478 = vsel %vm335, %v413, 0
        %v481 = vsel %vm335, %v414, 0
        %v484 = vsel %vm335, %v415, 0
        %v487 = vsel %vm335, %v416, 0
        %v490 = vsel %vm335, %v417, 0
        %v493 = vsel %vm335, %v418, 0
        %v496 = vsel %vm335, %v419, 0
        %v499 = vsel %vm335, %v420, 0
        %v502 = vsel %vm335, %v437, 0
        %v505 = vsel %vm335, %v438, 0
        %v508 = vsel %vm335, %v439, 0
        %v511 = vsel %vm335, %v440, 0
        %v514 = vsel %vm335, %v441, 0
        %v517 = vsel %vm335, %v442, 0
        %v520 = vsel %vm335, %v443, 0
        %v523 = vsel %vm335, %v444, 0
        %v526 = vsel %vm335, %v445, 0
        %v529 = vsel %vm335, %v446, 0
        %v532 = vsel %vm335, %v447, 0
        %v535 = vsel %vm335, %v448, 0
        %v538 = vsel %vm335, %v449, 0
        %v541 = vsel %vm335, %v450, 0
        %v544 = vsel %vm335, %v451, 0
        %v547 = vsel %vm335, %v452, 0
        %v550 = vsel %vm339, %v362, 0
        %v553 = vsel %vm339, %v382, 0
        %555 = vmatpush.msra.mxu0 0.0
        %556 = vmatpush.msra.mxu0 0.0
        %557 = vmatpush.msra.mxu0 0.0
        %558 = vmatpush.msra.mxu0 0.0
        %559 = vmatpush.msra.mxu0 0.0
        %560 = vmatpush.msra.mxu0 0.0
        %561 = vmatpush.msra.mxu0 0.0
        %562 = vmatpush.msra.mxu0 0.0
        %563 = vmatpush.msra.mxu0 0.0
        %564 = vmatpush.msra.mxu0 0.0
        %565 = vmatpush.msra.mxu0 0.0
        %566 = vmatpush.msra.mxu0 0.0
        %567 = vmatpush.msra.mxu0 0.0
        %568 = vmatpush.msra.mxu0 0.0
        %569 = vmatpush.msra.mxu0 0.0
        %570 = vmatpush.msra.mxu0 %v550
        %571 = vmatmul.f32.gmra.mxu0 %v454
        %v572 = vpop.f32.mrf.mxu0
        %v573 = vadd.f32 0.0, %v572
        %574 = vmatmul.f32.gmra.mxu0 %v457
        %v575 = vpop.f32.mrf.mxu0
        %v576 = vadd.f32 0.0, %v575
        %577 = vmatmul.f32.gmra.mxu0 %v460
        %v578 = vpop.f32.mrf.mxu0
        %v579 = vadd.f32 0.0, %v578
        %580 = vmatmul.f32.gmra.mxu0 %v463
        %v581 = vpop.f32.mrf.mxu0
        %v582 = vadd.f32 0.0, %v581
        %583 = vmatmul.f32.gmra.mxu0 %v466
        %v584 = vpop.f32.mrf.mxu0
        %v585 = vadd.f32 0.0, %v584
        %586 = vmatmul.f32.gmra.mxu0 %v469
        %v587 = vpop.f32.mrf.mxu0
        %v588 = vadd.f32 0.0, %v587
        %589 = vmatmul.f32.gmra.mxu0 %v472
        %v590 = vpop.f32.mrf.mxu0
        %v591 = vadd.f32 0.0, %v590
        %592 = vmatmul.f32.gmra.mxu0 %v475
        %v593 = vpop.f32.mrf.mxu0
        %v594 = vadd.f32 0.0, %v593
        %595 = vmatmul.f32.gmra.mxu0 %v478
        %v596 = vpop.f32.mrf.mxu0
        %v597 = vadd.f32 0.0, %v596
        %598 = vmatmul.f32.gmra.mxu0 %v481
        %v599 = vpop.f32.mrf.mxu0
        %v600 = vadd.f32 0.0, %v599
        %601 = vmatmul.f32.gmra.mxu0 %v484
        %v602 = vpop.f32.mrf.mxu0
        %v603 = vadd.f32 0.0, %v602
        %604 = vmatmul.f32.gmra.mxu0 %v487
        %v605 = vpop.f32.mrf.mxu0
        %v606 = vadd.f32 0.0, %v605
        %607 = vmatmul.f32.gmra.mxu0 %v490
        %v608 = vpop.f32.mrf.mxu0
        %v609 = vadd.f32 0.0, %v608
        %610 = vmatmul.f32.gmra.mxu0 %v493
        %v611 = vpop.f32.mrf.mxu0
        %v612 = vadd.f32 0.0, %v611
        %613 = vmatmul.f32.gmra.mxu0 %v496
        %v614 = vpop.f32.mrf.mxu0
        %v615 = vadd.f32 0.0, %v614
        %616 = vmatmul.f32.gmra.mxu0 %v499
        %v617 = vpop.f32.mrf.mxu0
        %v618 = vadd.f32 0.0, %v617
        %619 = vmatmul.f32.gmra.mxu0 %v502
        %v620 = vpop.f32.mrf.mxu0
        %v621 = vadd.f32 0.0, %v620
        %622 = vmatmul.f32.gmra.mxu0 %v505
        %v623 = vpop.f32.mrf.mxu0
        %v624 = vadd.f32 0.0, %v623
        %625 = vmatmul.f32.gmra.mxu0 %v508
        %v626 = vpop.f32.mrf.mxu0
        %v627 = vadd.f32 0.0, %v626
        %628 = vmatmul.f32.gmra.mxu0 %v511
        %v629 = vpop.f32.mrf.mxu0
        %v630 = vadd.f32 0.0, %v629
        %631 = vmatmul.f32.gmra.mxu0 %v514
        %v632 = vpop.f32.mrf.mxu0
        %v633 = vadd.f32 0.0, %v632
        %634 = vmatmul.f32.gmra.mxu0 %v517
        %v635 = vpop.f32.mrf.mxu0
        %v636 = vadd.f32 0.0, %v635
        %637 = vmatmul.f32.gmra.mxu0 %v520
        %v638 = vpop.f32.mrf.mxu0
        %v639 = vadd.f32 0.0, %v638
        %640 = vmatmul.f32.gmra.mxu0 %v523
        %v641 = vpop.f32.mrf.mxu0
        %v642 = vadd.f32 0.0, %v641
        %643 = vmatmul.f32.gmra.mxu0 %v526
        %v644 = vpop.f32.mrf.mxu0
        %v645 = vadd.f32 0.0, %v644
        %646 = vmatmul.f32.gmra.mxu0 %v529
        %v647 = vpop.f32.mrf.mxu0
        %v648 = vadd.f32 0.0, %v647
        %649 = vmatmul.f32.gmra.mxu0 %v532
        %v650 = vpop.f32.mrf.mxu0
        %v651 = vadd.f32 0.0, %v650
        %652 = vmatmul.f32.gmra.mxu0 %v535
        %v653 = vpop.f32.mrf.mxu0
        %v654 = vadd.f32 0.0, %v653
        %655 = vmatmul.f32.gmra.mxu0 %v538
        %v656 = vpop.f32.mrf.mxu0
        %v657 = vadd.f32 0.0, %v656
        %658 = vmatmul.f32.gmra.mxu0 %v541
        %v659 = vpop.f32.mrf.mxu0
        %v660 = vadd.f32 0.0, %v659
        %661 = vmatmul.f32.gmra.mxu0 %v544
        %v662 = vpop.f32.mrf.mxu0
        %v663 = vadd.f32 0.0, %v662
        %664 = vmatmul.f32.gmra.mxu0 %v547
        %v665 = vpop.f32.mrf.mxu0
        %v666 = vadd.f32 0.0, %v665
        %667 = vdwg.mxu0
        %668 = vmatpush.msra.mxu0 0.0
        %669 = vmatpush.msra.mxu0 0.0
        %670 = vmatpush.msra.mxu0 0.0
        %671 = vmatpush.msra.mxu0 0.0
        %672 = vmatpush.msra.mxu0 0.0
        %673 = vmatpush.msra.mxu0 0.0
        %674 = vmatpush.msra.mxu0 0.0
        %675 = vmatpush.msra.mxu0 0.0
        %676 = vmatpush.msra.mxu0 0.0
        %677 = vmatpush.msra.mxu0 0.0
        %678 = vmatpush.msra.mxu0 0.0
        %679 = vmatpush.msra.mxu0 0.0
        %680 = vmatpush.msra.mxu0 0.0
        %681 = vmatpush.msra.mxu0 0.0
        %682 = vmatpush.msra.mxu0 0.0
        %683 = vmatpush.msra.mxu0 %v553
        %684 = vmatmul.f32.gmra.mxu0 %v454
        %v685 = vpop.f32.mrf.mxu0
        %v686 = vadd.f32 0.0, %v685
        %687 = vmatmul.f32.gmra.mxu0 %v457
        %v688 = vpop.f32.mrf.mxu0
        %v689 = vadd.f32 0.0, %v688
        %690 = vmatmul.f32.gmra.mxu0 %v460
        %v691 = vpop.f32.mrf.mxu0
        %v692 = vadd.f32 0.0, %v691
        %693 = vmatmul.f32.gmra.mxu0 %v463
        %v694 = vpop.f32.mrf.mxu0
        %v695 = vadd.f32 0.0, %v694
        %696 = vmatmul.f32.gmra.mxu0 %v466
        %v697 = vpop.f32.mrf.mxu0
        %v698 = vadd.f32 0.0, %v697
        %699 = vmatmul.f32.gmra.mxu0 %v469
        %v700 = vpop.f32.mrf.mxu0
        %v701 = vadd.f32 0.0, %v700
        %702 = vmatmul.f32.gmra.mxu0 %v472
        %v703 = vpop.f32.mrf.mxu0
        %v704 = vadd.f32 0.0, %v703
        %705 = vmatmul.f32.gmra.mxu0 %v475
        %v706 = vpop.f32.mrf.mxu0
        %v707 = vadd.f32 0.0, %v706
        %708 = vmatmul.f32.gmra.mxu0 %v478
        %v709 = vpop.f32.mrf.mxu0
        %v710 = vadd.f32 0.0, %v709
        %711 = vmatmul.f32.gmra.mxu0 %v481
        %v712 = vpop.f32.mrf.mxu0
        %v713 = vadd.f32 0.0, %v712
        %714 = vmatmul.f32.gmra.mxu0 %v484
        %v715 = vpop.f32.mrf.mxu0
        %v716 = vadd.f32 0.0, %v715
        %717 = vmatmul.f32.gmra.mxu0 %v487
        %v718 = vpop.f32.mrf.mxu0
        %v719 = vadd.f32 0.0, %v718
        %720 = vmatmul.f32.gmra.mxu0 %v490
        %v721 = vpop.f32.mrf.mxu0
        %v722 = vadd.f32 0.0, %v721
        %723 = vmatmul.f32.gmra.mxu0 %v493
        %v724 = vpop.f32.mrf.mxu0
        %v725 = vadd.f32 0.0, %v724
        %726 = vmatmul.f32.gmra.mxu0 %v496
        %v727 = vpop.f32.mrf.mxu0
        %v728 = vadd.f32 0.0, %v727
        %729 = vmatmul.f32.gmra.mxu0 %v499
        %v730 = vpop.f32.mrf.mxu0
        %v731 = vadd.f32 0.0, %v730
        %732 = vmatmul.f32.gmra.mxu0 %v502
        %v733 = vpop.f32.mrf.mxu0
        %v734 = vadd.f32 0.0, %v733
        %735 = vmatmul.f32.gmra.mxu0 %v505
        %v736 = vpop.f32.mrf.mxu0
        %v737 = vadd.f32 0.0, %v736
        %738 = vmatmul.f32.gmra.mxu0 %v508
        %v739 = vpop.f32.mrf.mxu0
        %v740 = vadd.f32 0.0, %v739
        %741 = vmatmul.f32.gmra.mxu0 %v511
        %v742 = vpop.f32.mrf.mxu0
        %v743 = vadd.f32 0.0, %v742
        %744 = vmatmul.f32.gmra.mxu0 %v514
        %v745 = vpop.f32.mrf.mxu0
        %v746 = vadd.f32 0.0, %v745
        %747 = vmatmul.f32.gmra.mxu0 %v517
        %v748 = vpop.f32.mrf.mxu0
        %v749 = vadd.f32 0.0, %v748
        %750 = vmatmul.f32.gmra.mxu0 %v520
        %v751 = vpop.f32.mrf.mxu0
        %v752 = vadd.f32 0.0, %v751
        %753 = vmatmul.f32.gmra.mxu0 %v523
        %v754 = vpop.f32.mrf.mxu0
        %v755 = vadd.f32 0.0, %v754
        %756 = vmatmul.f32.gmra.mxu0 %v526
        %v757 = vpop.f32.mrf.mxu0
        %v758 = vadd.f32 0.0, %v757
        %759 = vmatmul.f32.gmra.mxu0 %v529
        %v760 = vpop.f32.mrf.mxu0
        %v761 = vadd.f32 0.0, %v760
        %762 = vmatmul.f32.gmra.mxu0 %v532
        %v763 = vpop.f32.mrf.mxu0
        %v764 = vadd.f32 0.0, %v763
        %765 = vmatmul.f32.gmra.mxu0 %v535
        %v766 = vpop.f32.mrf.mxu0
        %v767 = vadd.f32 0.0, %v766
        %768 = vmatmul.f32.gmra.mxu0 %v538
        %v769 = vpop.f32.mrf.mxu0
        %v770 = vadd.f32 0.0, %v769
        %771 = vmatmul.f32.gmra.mxu0 %v541
        %v772 = vpop.f32.mrf.mxu0
        %v773 = vadd.f32 0.0, %v772
        %774 = vmatmul.f32.gmra.mxu0 %v544
        %v775 = vpop.f32.mrf.mxu0
        %v776 = vadd.f32 0.0, %v775
        %777 = vmatmul.f32.gmra.mxu0 %v547
        %v778 = vpop.f32.mrf.mxu0
        %v779 = vadd.f32 0.0, %v778
        %780 = vdwg.mxu0
        %v781 = vmax.f32 %v573, %v579
        %v782 = vmax.f32 %v576, %v582
        %v783 = vmax.f32 %v781, %v585
        %v784 = vmax.f32 %v782, %v588
        %v785 = vmax.f32 %v783, %v591
        %v786 = vmax.f32 %v784, %v594
        %v787 = vmax.f32 %v785, %v597
        %v788 = vmax.f32 %v786, %v600
        %v789 = vmax.f32 %v787, %v603
        %v790 = vmax.f32 %v788, %v606
        %v791 = vmax.f32 %v789, %v609
        %v792 = vmax.f32 %v790, %v612
        %v793 = vmax.f32 %v791, %v615
        %v794 = vmax.f32 %v792, %v618
        %v795 = vmax.f32 %v793, %v621
        %v796 = vmax.f32 %v794, %v624
        %v797 = vmax.f32 %v795, %v627
        %v798 = vmax.f32 %v796, %v630
        %v799 = vmax.f32 %v797, %v633
        %v800 = vmax.f32 %v798, %v636
        %v801 = vmax.f32 %v799, %v639
        %v802 = vmax.f32 %v800, %v642
        %v803 = vmax.f32 %v801, %v645
        %v804 = vmax.f32 %v802, %v648
        %v805 = vmax.f32 %v803, %v651
        %v806 = vmax.f32 %v804, %v654
        %v807 = vmax.f32 %v805, %v657
        %v808 = vmax.f32 %v806, %v660
        %v809 = vmax.f32 %v807, %v663
        %v810 = vmax.f32 %v808, %v666
        %v811 = vmax.f32 %v809, %v810
        %v812 = vrot.slane %v811, 4
        %v813 = vmax.f32 %v811, %v812
        %v814 = vrot.slane %v813, 2
        %v815 = vmax.f32 %v813, %v814
        %v816 = vrot.slane %v815, 1
        %v817 = vmax.f32 %v815, %v816
        %v818 = vmax.f32 %v686, %v692
        %v819 = vmax.f32 %v689, %v695
        %v820 = vmax.f32 %v818, %v698
        %v821 = vmax.f32 %v819, %v701
        %v822 = vmax.f32 %v820, %v704
        %v823 = vmax.f32 %v821, %v707
        %v824 = vmax.f32 %v822, %v710
        %v825 = vmax.f32 %v823, %v713
        %v826 = vmax.f32 %v824, %v716
        %v827 = vmax.f32 %v825, %v719
        %v828 = vmax.f32 %v826, %v722
        %v829 = vmax.f32 %v827, %v725
        %v830 = vmax.f32 %v828, %v728
        %v831 = vmax.f32 %v829, %v731
        %v832 = vmax.f32 %v830, %v734
        %v833 = vmax.f32 %v831, %v737
        %v834 = vmax.f32 %v832, %v740
        %v835 = vmax.f32 %v833, %v743
        %v836 = vmax.f32 %v834, %v746
        %v837 = vmax.f32 %v835, %v749
        %v838 = vmax.f32 %v836, %v752
        %v839 = vmax.f32 %v837, %v755
        %v840 = vmax.f32 %v838, %v758
        %v841 = vmax.f32 %v839, %v761
        %v842 = vmax.f32 %v840, %v764
        %v843 = vmax.f32 %v841, %v767
        %v844 = vmax.f32 %v842, %v770
        %v845 = vmax.f32 %v843, %v773
        %v846 = vmax.f32 %v844, %v776
        %v847 = vmax.f32 %v845, %v779
        %v848 = vmax.f32 %v846, %v847
        %v849 = vrot.slane %v848, 4
        %v850 = vmax.f32 %v848, %v849
        %v851 = vrot.slane %v850, 2
        %v852 = vmax.f32 %v850, %v851
        %v853 = vrot.slane %v852, 1
        %v854 = vmax.f32 %v852, %v853
        %v855 = vsub.f32 %v573, %v817
        %v856 = vsub.f32 %v686, %v854
        %v857 = vsub.f32 %v576, %v817
        %v858 = vsub.f32 %v689, %v854
        %v859 = vsub.f32 %v579, %v817
        %v860 = vsub.f32 %v692, %v854
        %v861 = vsub.f32 %v582, %v817
        %v862 = vsub.f32 %v695, %v854
        %v863 = vsub.f32 %v585, %v817
        %v864 = vsub.f32 %v698, %v854
        %v865 = vsub.f32 %v588, %v817
        %v866 = vsub.f32 %v701, %v854
        %v867 = vsub.f32 %v591, %v817
        %v868 = vsub.f32 %v704, %v854
        %v869 = vsub.f32 %v594, %v817
        %v870 = vsub.f32 %v707, %v854
        %v871 = vsub.f32 %v597, %v817
        %v872 = vsub.f32 %v710, %v854
        %v873 = vsub.f32 %v600, %v817
        %v874 = vsub.f32 %v713, %v854
        %v875 = vsub.f32 %v603, %v817
        %v876 = vsub.f32 %v716, %v854
        %v877 = vsub.f32 %v606, %v817
        %v878 = vsub.f32 %v719, %v854
        %v879 = vsub.f32 %v609, %v817
        %v880 = vsub.f32 %v722, %v854
        %v881 = vsub.f32 %v612, %v817
        %v882 = vsub.f32 %v725, %v854
        %v883 = vsub.f32 %v615, %v817
        %v884 = vsub.f32 %v728, %v854
        %v885 = vsub.f32 %v618, %v817
        %v886 = vsub.f32 %v731, %v854
        %v887 = vsub.f32 %v621, %v817
        %v888 = vsub.f32 %v734, %v854
        %v889 = vsub.f32 %v624, %v817
        %v890 = vsub.f32 %v737, %v854
        %v891 = vsub.f32 %v627, %v817
        %v892 = vsub.f32 %v740, %v854
        %v893 = vsub.f32 %v630, %v817
        %v894 = vsub.f32 %v743, %v854
        %v895 = vsub.f32 %v633, %v817
        %v896 = vsub.f32 %v746, %v854
        %v897 = vsub.f32 %v636, %v817
        %v898 = vsub.f32 %v749, %v854
        %v899 = vsub.f32 %v639, %v817
        %v900 = vsub.f32 %v752, %v854
        %v901 = vsub.f32 %v642, %v817
        %v902 = vsub.f32 %v755, %v854
        %v903 = vsub.f32 %v645, %v817
        %v904 = vsub.f32 %v758, %v854
        %v905 = vsub.f32 %v648, %v817
        %v906 = vsub.f32 %v761, %v854
        %v907 = vsub.f32 %v651, %v817
        %v908 = vsub.f32 %v764, %v854
        %v909 = vsub.f32 %v654, %v817
        %v910 = vsub.f32 %v767, %v854
        %v911 = vsub.f32 %v657, %v817
        %v912 = vsub.f32 %v770, %v854
        %v913 = vsub.f32 %v660, %v817
        %v914 = vsub.f32 %v773, %v854
        %v915 = vsub.f32 %v663, %v817
        %v916 = vsub.f32 %v776, %v854
        %v917 = vsub.f32 %v666, %v817
        %v918 = vsub.f32 %v779, %v854
        %v919 = vmul.f32 %v855, 1.442695
        %v920 = vpow.pop %v919
        %v921 = vmul.f32 %v856, 1.442695
        %v922 = vpow.pop %v921
        %v923 = vmul.f32 %v857, 1.442695
        %v924 = vpow.pop %v923
        %v925 = vmul.f32 %v858, 1.442695
        %v926 = vpow.pop %v925
        %v927 = vmul.f32 %v859, 1.442695
        %v928 = vpow.pop %v927
        %v929 = vmul.f32 %v860, 1.442695
        %v930 = vpow.pop %v929
        %v931 = vmul.f32 %v861, 1.442695
        %v932 = vpow.pop %v931
        %v933 = vmul.f32 %v862, 1.442695
        %v934 = vpow.pop %v933
        %v935 = vmul.f32 %v863, 1.442695
        %v936 = vpow.pop %v935
        %v937 = vmul.f32 %v864, 1.442695
        %v938 = vpow.pop %v937
        %v939 = vmul.f32 %v865, 1.442695
        %v940 = vpow.pop %v939
        %v941 = vmul.f32 %v866, 1.442695
        %v942 = vpow.pop %v941
        %v943 = vmul.f32 %v867, 1.442695
        %v944 = vpow.pop %v943
        %v945 = vmul.f32 %v868, 1.442695
        %v946 = vpow.pop %v945
        %v947 = vmul.f32 %v869, 1.442695
        %v948 = vpow.pop %v947
        %v949 = vmul.f32 %v870, 1.442695
        %v950 = vpow.pop %v949
        %v951 = vmul.f32 %v871, 1.442695
        %v952 = vpow.pop %v951
        %v953 = vmul.f32 %v872, 1.442695
        %v954 = vpow.pop %v953
        %v955 = vmul.f32 %v873, 1.442695
        %v956 = vpow.pop %v955
        %v957 = vmul.f32 %v874, 1.442695
        %v958 = vpow.pop %v957
        %v959 = vmul.f32 %v875, 1.442695
        %v960 = vpow.pop %v959
        %v961 = vmul.f32 %v876, 1.442695
        %v962 = vpow.pop %v961
        %v963 = vmul.f32 %v877, 1.442695
        %v964 = vpow.pop %v963
        %v965 = vmul.f32 %v878, 1.442695
        %v966 = vpow.pop %v965
        %v967 = vmul.f32 %v879, 1.442695
        %v968 = vpow.pop %v967
        %v969 = vmul.f32 %v880, 1.442695
        %v970 = vpow.pop %v969
        %v971 = vmul.f32 %v881, 1.442695
        %v972 = vpow.pop %v971
        %v973 = vmul.f32 %v882, 1.442695
        %v974 = vpow.pop %v973
        %v975 = vmul.f32 %v883, 1.442695
        %v976 = vpow.pop %v975
        %v977 = vmul.f32 %v884, 1.442695
        %v978 = vpow.pop %v977
        %v979 = vmul.f32 %v885, 1.442695
        %v980 = vpow.pop %v979
        %v981 = vmul.f32 %v886, 1.442695
        %v982 = vpow.pop %v981
        %v983 = vmul.f32 %v887, 1.442695
        %v984 = vpow.pop %v983
        %v985 = vmul.f32 %v888, 1.442695
        %v986 = vpow.pop %v985
        %v987 = vmul.f32 %v889, 1.442695
        %v988 = vpow.pop %v987
        %v989 = vmul.f32 %v890, 1.442695
        %v990 = vpow.pop %v989
        %v991 = vmul.f32 %v891, 1.442695
        %v992 = vpow.pop %v991
        %v993 = vmul.f32 %v892, 1.442695
        %v994 = vpow.pop %v993
        %v995 = vmul.f32 %v893, 1.442695
        %v996 = vpow.pop %v995
        %v997 = vmul.f32 %v894, 1.442695
        %v998 = vpow.pop %v997
        %v999 = vmul.f32 %v895, 1.442695
        %v1000 = vpow.pop %v999
        %v1001 = vmul.f32 %v896, 1.442695
        %v1002 = vpow.pop %v1001
        %v1003 = vmul.f32 %v897, 1.442695
        %v1004 = vpow.pop %v1003
        %v1005 = vmul.f32 %v898, 1.442695
        %v1006 = vpow.pop %v1005
        %v1007 = vmul.f32 %v899, 1.442695
        %v1008 = vpow.pop %v1007
        %v1009 = vmul.f32 %v900, 1.442695
        %v1010 = vpow.pop %v1009
        %v1011 = vmul.f32 %v901, 1.442695
        %v1012 = vpow.pop %v1011
        %v1013 = vmul.f32 %v902, 1.442695
        %v1014 = vpow.pop %v1013
        %v1015 = vmul.f32 %v903, 1.442695
        %v1016 = vpow.pop %v1015
        %v1017 = vmul.f32 %v904, 1.442695
        %v1018 = vpow.pop %v1017
        %v1019 = vmul.f32 %v905, 1.442695
        %v1020 = vpow.pop %v1019
        %v1021 = vmul.f32 %v906, 1.442695
        %v1022 = vpow.pop %v1021
        %v1023 = vmul.f32 %v907, 1.442695
        %v1024 = vpow.pop %v1023
        %v1025 = vmul.f32 %v908, 1.442695
        %v1026 = vpow.pop %v1025
        %v1027 = vmul.f32 %v909, 1.442695
        %v1028 = vpow.pop %v1027
        %v1029 = vmul.f32 %v910, 1.442695
        %v1030 = vpow.pop %v1029
        %v1031 = vmul.f32 %v911, 1.442695
        %v1032 = vpow.pop %v1031
        %v1033 = vmul.f32 %v912, 1.442695
        %v1034 = vpow.pop %v1033
        %v1035 = vmul.f32 %v913, 1.442695
        %v1036 = vpow.pop %v1035
        %v1037 = vmul.f32 %v914, 1.442695
        %v1038 = vpow.pop %v1037
        %v1039 = vmul.f32 %v915, 1.442695
        %v1040 = vpow.pop %v1039
        %v1041 = vmul.f32 %v916, 1.442695
        %v1042 = vpow.pop %v1041
        %v1043 = vmul.f32 %v917, 1.442695
        %v1044 = vpow.pop %v1043
        %v1045 = vmul.f32 %v918, 1.442695
        %v1046 = vpow.pop %v1045
        %v1047 = vadd.f32 %v920, %v924
        %v1048 = vadd.f32 %v1047, %v928
        %v1049 = vadd.f32 %v1048, %v932
        %v1050 = vadd.f32 %v1049, %v936
        %v1051 = vadd.f32 %v1050, %v940
        %v1052 = vadd.f32 %v1051, %v944
        %v1053 = vadd.f32 %v1052, %v948
        %v1054 = vadd.f32 %v1053, %v952
        %v1055 = vadd.f32 %v1054, %v956
        %v1056 = vadd.f32 %v1055, %v960
        %v1057 = vadd.f32 %v1056, %v964
        %v1058 = vadd.f32 %v1057, %v968
        %v1059 = vadd.f32 %v1058, %v972
        %v1060 = vadd.f32 %v1059, %v976
        %v1061 = vadd.f32 %v1060, %v980
        %v1062 = vadd.f32 %v1061, %v984
        %v1063 = vadd.f32 %v1062, %v988
        %v1064 = vadd.f32 %v1063, %v992
        %v1065 = vadd.f32 %v1064, %v996
        %v1066 = vadd.f32 %v1065, %v1000
        %v1067 = vadd.f32 %v1066, %v1004
        %v1068 = vadd.f32 %v1067, %v1008
        %v1069 = vadd.f32 %v1068, %v1012
        %v1070 = vadd.f32 %v1069, %v1016
        %v1071 = vadd.f32 %v1070, %v1020
        %v1072 = vadd.f32 %v1071, %v1024
        %v1073 = vadd.f32 %v1072, %v1028
        %v1074 = vadd.f32 %v1073, %v1032
        %v1075 = vadd.f32 %v1074, %v1036
        %v1076 = vadd.f32 %v1075, %v1040
        %v1077 = vadd.f32 %v1076, %v1044
        %v1078 = vrot.slane %v1077, 4
        %v1079 = vadd.f32 %v1077, %v1078
        %v1080 = vrot.slane %v1079, 2
        %v1081 = vadd.f32 %v1079, %v1080
        %v1082 = vrot.slane %v1081, 1
        %v1083 = vadd.f32 %v1081, %v1082
        %v1084 = vadd.f32 %v922, %v926
        %v1085 = vadd.f32 %v1084, %v930
        %v1086 = vadd.f32 %v1085, %v934
        %v1087 = vadd.f32 %v1086, %v938
        %v1088 = vadd.f32 %v1087, %v942
        %v1089 = vadd.f32 %v1088, %v946
        %v1090 = vadd.f32 %v1089, %v950
        %v1091 = vadd.f32 %v1090, %v954
        %v1092 = vadd.f32 %v1091, %v958
        %v1093 = vadd.f32 %v1092, %v962
        %v1094 = vadd.f32 %v1093, %v966
        %v1095 = vadd.f32 %v1094, %v970
        %v1096 = vadd.f32 %v1095, %v974
        %v1097 = vadd.f32 %v1096, %v978
        %v1098 = vadd.f32 %v1097, %v982
        %v1099 = vadd.f32 %v1098, %v986
        %v1100 = vadd.f32 %v1099, %v990
        %v1101 = vadd.f32 %v1100, %v994
        %v1102 = vadd.f32 %v1101, %v998
        %v1103 = vadd.f32 %v1102, %v1002
        %v1104 = vadd.f32 %v1103, %v1006
        %v1105 = vadd.f32 %v1104, %v1010
        %v1106 = vadd.f32 %v1105, %v1014
        %v1107 = vadd.f32 %v1106, %v1018
        %v1108 = vadd.f32 %v1107, %v1022
        %v1109 = vadd.f32 %v1108, %v1026
        %v1110 = vadd.f32 %v1109, %v1030
        %v1111 = vadd.f32 %v1110, %v1034
        %v1112 = vadd.f32 %v1111, %v1038
        %v1113 = vadd.f32 %v1112, %v1042
        %v1114 = vadd.f32 %v1113, %v1046
        %v1115 = vrot.slane %v1114, 4
        %v1116 = vadd.f32 %v1114, %v1115
        %v1117 = vrot.slane %v1116, 2
        %v1118 = vadd.f32 %v1116, %v1117
        %v1119 = vrot.slane %v1118, 1
        %v1120 = vadd.f32 %v1118, %v1119
        %v1121 = vld [vmem:[%s267] sm:$0xf]
        %v1122 = vld [vmem:[%s318] sm:$0xf]
        %1124 = vset.pattern.permute.xlu0 0
        %1125 = vperm.xlu0 %1124, %v1122
        %v1126 = vpop.permute.xlu0 %1125
        %1128 = vst [vmem:[#allocation1] ss:$2 sm:$0xff] %v323
        %v1129 = vld.sshfl [vmem:[#allocation1] sm:$0xff pattern:$0x75316420]
        %v1130 = vld.sshfl [vmem:[#allocation1 + $0x8] sm:$0xff pattern:$0x75316420]
        %v1132 = vsel %vm335, %v1121, 0
        %v1134 = vsel %vm339, %v1129, 0
        %v1136 = vsel %vm339, %v1130, 0
        %1138 = vmatpush.msra.mxu0 0.0
        %1139 = vmatpush.msra.mxu0 0.0
        %1140 = vmatpush.msra.mxu0 0.0
        %1141 = vmatpush.msra.mxu0 0.0
        %1142 = vmatpush.msra.mxu0 0.0
        %1143 = vmatpush.msra.mxu0 0.0
        %1144 = vmatpush.msra.mxu0 0.0
        %1145 = vmatpush.msra.mxu0 0.0
        %1146 = vmatpush.msra.mxu0 0.0
        %1147 = vmatpush.msra.mxu0 0.0
        %1148 = vmatpush.msra.mxu0 0.0
        %1149 = vmatpush.msra.mxu0 0.0
        %1150 = vmatpush.msra.mxu0 0.0
        %1151 = vmatpush.msra.mxu0 0.0
        %1152 = vmatpush.msra.mxu0 0.0
        %1153 = vmatpush.msra.mxu0 %v1134
        %1154 = vmatmul.f32.gmra.mxu0 %v1132
        %v1155 = vpop.f32.mrf.mxu0
        %v1156 = vadd.f32 %v1126, %v1155
        %1157 = vdwg.mxu0
        %1158 = vmatpush.msra.mxu0 0.0
        %1159 = vmatpush.msra.mxu0 0.0
        %1160 = vmatpush.msra.mxu0 0.0
        %1161 = vmatpush.msra.mxu0 0.0
        %1162 = vmatpush.msra.mxu0 0.0
        %1163 = vmatpush.msra.mxu0 0.0
        %1164 = vmatpush.msra.mxu0 0.0
        %1165 = vmatpush.msra.mxu0 0.0
        %1166 = vmatpush.msra.mxu0 0.0
        %1167 = vmatpush.msra.mxu0 0.0
        %1168 = vmatpush.msra.mxu0 0.0
        %1169 = vmatpush.msra.mxu0 0.0
        %1170 = vmatpush.msra.mxu0 0.0
        %1171 = vmatpush.msra.mxu0 0.0
        %1172 = vmatpush.msra.mxu0 0.0
        %1173 = vmatpush.msra.mxu0 %v1136
        %1174 = vmatmul.f32.gmra.mxu0 %v1132
        %v1175 = vpop.f32.mrf.mxu0
        %v1176 = vadd.f32 %v1126, %v1175
        %1177 = vdwg.mxu0
        %1178 = vmatpush.msra.mxu0 %v980
        %1179 = vmatpush.msra.mxu0 %v976
        %1180 = vmatpush.msra.mxu0 %v972
        %1181 = vmatpush.msra.mxu0 %v968
        %1182 = vmatpush.msra.mxu0 %v964
        %1183 = vmatpush.msra.mxu0 %v960
        %1184 = vmatpush.msra.mxu0 %v956
        %1185 = vmatpush.msra.mxu0 %v952
        %1186 = vmatpush.msra.mxu0 %v948
        %1187 = vmatpush.msra.mxu0 %v944
        %1188 = vmatpush.msra.mxu0 %v940
        %1189 = vmatpush.msra.mxu0 %v936
        %1190 = vmatpush.msra.mxu0 %v932
        %1191 = vmatpush.msra.mxu0 %v928
        %1192 = vmatpush.msra.mxu0 %v924
        %1193 = vmatpush.msra.mxu0 %v920
        %1194 = vmatmul.f32.gmra.mxu0 %v1156
        %v1195 = vpop.f32.mrf.mxu0
        %v1196 = vadd.f32 0.0, %v1195
        %1197 = vdwg.mxu0
        %1198 = vmatpush.msra.mxu0 %v1044
        %1199 = vmatpush.msra.mxu0 %v1040
        %1200 = vmatpush.msra.mxu0 %v1036
        %1201 = vmatpush.msra.mxu0 %v1032
        %1202 = vmatpush.msra.mxu0 %v1028
        %1203 = vmatpush.msra.mxu0 %v1024
        %1204 = vmatpush.msra.mxu0 %v1020
        %1205 = vmatpush.msra.mxu0 %v1016
        %1206 = vmatpush.msra.mxu0 %v1012
        %1207 = vmatpush.msra.mxu0 %v1008
        %1208 = vmatpush.msra.mxu0 %v1004
        %1209 = vmatpush.msra.mxu0 %v1000
        %1210 = vmatpush.msra.mxu0 %v996
        %1211 = vmatpush.msra.mxu0 %v992
        %1212 = vmatpush.msra.mxu0 %v988
        %1213 = vmatpush.msra.mxu0 %v984
        %1214 = vmatmul.f32.gmra.mxu0 %v1176
        %v1215 = vpop.f32.mrf.mxu0
        %v1216 = vadd.f32 %v1196, %v1215
        %1217 = vdwg.mxu0
        %1218 = vmatpush.msra.mxu0 %v982
        %1219 = vmatpush.msra.mxu0 %v978
        %1220 = vmatpush.msra.mxu0 %v974
        %1221 = vmatpush.msra.mxu0 %v970
        %1222 = vmatpush.msra.mxu0 %v966
        %1223 = vmatpush.msra.mxu0 %v962
        %1224 = vmatpush.msra.mxu0 %v958
        %1225 = vmatpush.msra.mxu0 %v954
        %1226 = vmatpush.msra.mxu0 %v950
        %1227 = vmatpush.msra.mxu0 %v946
        %1228 = vmatpush.msra.mxu0 %v942
        %1229 = vmatpush.msra.mxu0 %v938
        %1230 = vmatpush.msra.mxu0 %v934
        %1231 = vmatpush.msra.mxu0 %v930
        %1232 = vmatpush.msra.mxu0 %v926
        %1233 = vmatpush.msra.mxu0 %v922
        %1234 = vmatmul.f32.gmra.mxu0 %v1156
        %v1235 = vpop.f32.mrf.mxu0
        %v1236 = vadd.f32 0.0, %v1235
        %1237 = vdwg.mxu0
        %1238 = vmatpush.msra.mxu0 %v1046
        %1239 = vmatpush.msra.mxu0 %v1042
        %1240 = vmatpush.msra.mxu0 %v1038
        %1241 = vmatpush.msra.mxu0 %v1034
        %1242 = vmatpush.msra.mxu0 %v1030
        %1243 = vmatpush.msra.mxu0 %v1026
        %1244 = vmatpush.msra.mxu0 %v1022
        %1245 = vmatpush.msra.mxu0 %v1018
        %1246 = vmatpush.msra.mxu0 %v1014
        %1247 = vmatpush.msra.mxu0 %v1010
        %1248 = vmatpush.msra.mxu0 %v1006
        %1249 = vmatpush.msra.mxu0 %v1002
        %1250 = vmatpush.msra.mxu0 %v998
        %1251 = vmatpush.msra.mxu0 %v994
        %1252 = vmatpush.msra.mxu0 %v990
        %1253 = vmatpush.msra.mxu0 %v986
        %1254 = vmatmul.f32.gmra.mxu0 %v1176
        %v1255 = vpop.f32.mrf.mxu0
        %v1256 = vadd.f32 %v1236, %v1255
        %1257 = vdwg.mxu0
        %v1258 = vrcp.pop %v1083
        %v1259 = vmul.f32 %v1083, %v1258
        %v1260 = vsub.f32 1.0, %v1259
        %v1261 = vmul.f32 %v1258, %v1260
        %v1262 = vadd.f32 %v1258, %v1261
        %vm1263 = vweird.f32 %v1083
        %vm1264 = vweird.f32 %v1258
        %vm1265 = vmor %vm1263, %vm1264
        %v1266 = vsel %vm1265, %v1258, %v1262
        %v1267 = vand.u32 2147483647, %v1083
        %vm1268 = vcmp.eq.f32.partialorder %v1267, 8.507059e+37
        %v1269 = vand.u32 %v1083, 2147483648
        %v1270 = vor.u32 1.1754944e-38, %v1269
        %v1271 = vsel %vm1268, %v1270, %v1266
        %v1272 = vmul.f32 %v1216, %v1271
        %v1273 = vrcp.pop %v1120
        %v1274 = vmul.f32 %v1120, %v1273
        %v1275 = vsub.f32 1.0, %v1274
        %v1276 = vmul.f32 %v1273, %v1275
        %v1277 = vadd.f32 %v1273, %v1276
        %vm1278 = vweird.f32 %v1120
        %vm1279 = vweird.f32 %v1273
        %vm1280 = vmor %vm1278, %vm1279
        %v1281 = vsel %vm1280, %v1273, %v1277
        %v1282 = vand.u32 2147483647, %v1120
        %vm1283 = vcmp.eq.f32.partialorder %v1282, 8.507059e+37
        %v1284 = vand.u32 %v1120, 2147483648
        %v1285 = vor.u32 1.1754944e-38, %v1284
        %v1286 = vsel %vm1283, %v1285, %v1281
        %v1287 = vmul.f32 %v1256, %v1286
        %v1288 = vld [vmem:[%s322] sm:$0xf]
        %1290 = vset.pattern.permute.xlu0 0
        %1291 = vperm.xlu0 %1290, %v1288
        %v1292 = vpop.permute.xlu0 %1291
        %1294 = vst [vmem:[#allocation1] ss:$2 sm:$0xff] %v323
        %v1295 = vld.sshfl [vmem:[#allocation1] sm:$0xff pattern:$0x75316420]
        %v1296 = vld.sshfl [vmem:[#allocation1 + $0x8] sm:$0xff pattern:$0x75316420]
        %v1299 = vmul.f32 %v1292, %v1295
        %v1300 = vmul.f32 %v1292, %v1296
        %v1301 = vadd.f32 %v1272, %v1299
        %v1302 = vadd.f32 %v1287, %v1300
        %v1305 = vrot.slane %v1302, 4
        %v1306 = vsel %vm339, %v1301, %v1305
        %1308 = vst [vmem:[%s309] sm:$0xff] %v1306
        %s1309 = sand.u32 %s177, 1
        %s1310 = scalar_lea.sflag [#allocation4], %s1309
        %s1311 = sand.u32 %s177, 1
        %s1312 = smul.addr %s1311, 8
        %s1313 = scalar_lea.vmem [#allocation5], %s1312
        // Predicated region
        $region49: #{tpu_custom_call.1} parent=43 // pred_check
          %p1314 = pneg %p187
        $region50: #{tpu_custom_call.1} parent=43 // pred_check_branch
          %1316 = sbr.rel (%p1314) target = $region52
        $region51: #{tpu_custom_call.1} parent=43 // pred_region
          %1318 = vsyncadd %s1310, 0
          %s1319 = smul.addr %s23, 2
          %s1320 = smul.addr %s1319, 4
          %s1321 = scalar_lea.hbm %s6, %s1320
          %s1323 = sshll.u32 %s1313, 4
          %s1324 = int_to_ptr.vmem [resolvable:$true] %s1323
          %s1325 = sshll.u32 %s1321, 4
          %s1326 = int_to_ptr.hbm [resolvable:$true] %s1325
          %1328 = dma.vmem_to_hbm [thread:$0]  %s1324, 128, %s1326, %s1310
        $region52: #{tpu_custom_call.1} parent=43 // pred_fallthru
          _
      $region44: #{tpu_custom_call.1} parent=5 // pred_fallthru
        _
      %p1329 = scmp.le.s32.totalorder 2, %s18
      // Predicated region
      $region53: #{tpu_custom_call.1} parent=5 // pred_check
        %p1330 = pneg %p1329
      $region54: #{tpu_custom_call.1} parent=5 // pred_check_branch
        %1332 = sbr.rel (%p1330) target = $region56
      $region55: #{tpu_custom_call.1} parent=5 // pred_region
        %s1333 = ssub.s32 %s18, 2
        // Predicated region
        $region57: #{tpu_custom_call.1} parent=55 // pred_check
          %p1334 = pneg %p193
        $region58: #{tpu_custom_call.1} parent=55 // pred_check_branch
          %1336 = sbr.rel (%p1334) target = $region60
        $region59: #{tpu_custom_call.1} parent=55 // pred_region
          %s1337 = sand.u32 %s178, 1
          %s1338 = scalar_lea.sflag [#allocation4], %s1337
          %s1339 = sand.u32 %s178, 1
          %s1340 = smul.addr %s1339, 8
          %s1341 = scalar_lea.vmem [#allocation5], %s1340
          %1343 = dma.done %s1338, 128
        $region60: #{tpu_custom_call.1} parent=55 // pred_fallthru
          _
      $region56: #{tpu_custom_call.1} parent=5 // pred_fallthru
        _
    $region6: #{tpu_custom_call.1} parent=1 // loop_footer
      %s22 = sadd.s32 1, %s18
    $region7: #{tpu_custom_call.1} parent=1 // loop_footer_branch
      %17 = sbr.rel target = $region3
    $region8: #{tpu_custom_call.1} parent=1 // loop_exit
      _
    %1344 = vsyncpa [#allocation3], 1
    %s1345 = scalar_lea.sflag [#allocation3], 1
    %1346 = vsyncpa %s1345, 1
    %1347 = vsyncpa [#allocation4], 1
    %s1348 = scalar_lea.sflag [#allocation4], 1
    %1349 = vsyncpa %s1348, 1

</llo_original>
